<compile_context>
chip_gen: v6e
topology: v6e:2x2x1
jax: 0.10.0
libtpu: 0.0.40
codegen_flags: <defaults>
</compile_context>

<pallas_src>
import functools
import math

import jax
import jax.numpy as jnp
from jax.experimental import pallas as pl
from jax.experimental.pallas import tpu as pltpu


_VMEM_LIMIT_BYTES = 32 * 1024 * 1024    # safe across v5e / v6e / v7x
_BLOCK_BYTE_BUDGET = 4 * 1024 * 1024    # per input block (x2 for double buffer)
_LANE_TILE_CANDIDATES = (4096, 2048, 1024, 512, 256, 128)


def _pick_lane_tile(L, rows, itemsize):
    """Largest lane tile dividing L whose (rows, tile) block fits the budget."""
    if rows * L * itemsize <= _BLOCK_BYTE_BUDGET:
        return L
    for tl in _LANE_TILE_CANDIDATES:
        if L % tl == 0 and rows * tl * itemsize <= _BLOCK_BYTE_BUDGET:
            return tl
    return None


# -----------------------------------------------------------------------------
# Path 1: reduce over the last (lane) axis of a 2D slab (M, L).
# -----------------------------------------------------------------------------
def _mean_lane_kernel(x_ref, o_ref, acc_ref, *, inv_l):
    k = pl.program_id(1)

    @pl.when(k == 0)
    def _init():
        acc_ref[...] = jnp.zeros_like(acc_ref)

    x = x_ref[...].astype(jnp.float32)
    acc_ref[...] += jnp.sum(x, axis=-1, keepdims=True)

    @pl.when(k == pl.num_programs(1) - 1)
    def _store():
        o_ref[...] = (acc_ref[...] * inv_l).astype(o_ref.dtype)


def _mean_lane_reduce_2d(x2d, tm, tl):
    M, L = x2d.shape
    assert L % tl == 0, (L, tl)
    itemsize = jnp.dtype(x2d.dtype).itemsize
    grid = (pl.cdiv(M, tm), L // tl)
    kernel = functools.partial(_mean_lane_kernel, inv_l=1.0 / float(L))
    cost = pl.CostEstimate(
        flops=M * L,
        transcendentals=0,
        bytes_accessed=M * L * itemsize + M * itemsize,
    )
    out = pl.pallas_call(
        kernel,
        out_shape=jax.ShapeDtypeStruct((M, 1), x2d.dtype),
        grid_spec=pltpu.PrefetchScalarGridSpec(
            num_scalar_prefetch=0,
            grid=grid,
            in_specs=[pl.BlockSpec((tm, tl), lambda i, k: (i, k))],
            out_specs=pl.BlockSpec((tm, 1), lambda i, k: (i, 0)),
            scratch_shapes=[pltpu.VMEM((tm, 1), jnp.float32)],
        ),
        compiler_params=pltpu.CompilerParams(
            dimension_semantics=("parallel", "arbitrary"),
            vmem_limit_bytes=_VMEM_LIMIT_BYTES,
        ),
        cost_estimate=cost,
    )(x2d)
    return out[:, 0]


def _mean_last_axis(x2d):
    M, L = x2d.shape
    itemsize = jnp.dtype(x2d.dtype).itemsize
    tm = M if M <= 512 else 512
    tl = _pick_lane_tile(L, tm, itemsize)
    if tl is None:
        # L has no friendly divisor: keep the full-L block and shrink the row
        # tile to stay inside the VMEM budget instead.
        tm = max(8, (_BLOCK_BYTE_BUDGET // (L * itemsize)) // 8 * 8)
        tm = min(tm, M)
        tl = L
    return _mean_lane_reduce_2d(x2d, tm, tl)


# -----------------------------------------------------------------------------
# Path 2: reduce over the sublane (second-to-last) axis of a 3D slab (B, R, L).
# Output block (tb, tl) is lane-dense; no wrapper transpose when dim == -2.
# -----------------------------------------------------------------------------
def _mean_sublane_kernel(x_ref, o_ref, *, inv_r):
    x = x_ref[...].astype(jnp.float32)                    # (tb, R, tl)
    o_ref[...] = (jnp.sum(x, axis=1) * inv_r).astype(o_ref.dtype)


def _mean_sublane_reduce_3d(x3d, tb, tl):
    B, R, L = x3d.shape
    assert L % tl == 0, (L, tl)
    itemsize = jnp.dtype(x3d.dtype).itemsize
    grid = (pl.cdiv(B, tb), L // tl)
    kernel = functools.partial(_mean_sublane_kernel, inv_r=1.0 / float(R))
    cost = pl.CostEstimate(
        flops=B * R * L,
        transcendentals=0,
        bytes_accessed=B * R * L * itemsize + B * L * itemsize,
    )
    return pl.pallas_call(
        kernel,
        out_shape=jax.ShapeDtypeStruct((B, L), x3d.dtype),
        grid_spec=pltpu.PrefetchScalarGridSpec(
            num_scalar_prefetch=0,
            grid=grid,
            in_specs=[pl.BlockSpec((tb, R, tl), lambda b, j: (b, 0, j))],
            out_specs=pl.BlockSpec((tb, tl), lambda b, j: (b, j)),
        ),
        compiler_params=pltpu.CompilerParams(
            dimension_semantics=("parallel", "parallel"),
            vmem_limit_bytes=_VMEM_LIMIT_BYTES,
        ),
        cost_estimate=cost,
    )(x3d)


# -----------------------------------------------------------------------------
# Public wrapper: equivalent of GlobalAvgPool1D(dim)(x) == x.mean(dim=dim).
# -----------------------------------------------------------------------------
@functools.partial(jax.jit, static_argnames=("dim",))
def global_avg_pool_1d(x: jax.Array, dim: int) -> jax.Array:
    ndim = x.ndim
    axis = dim % ndim

    if axis == ndim - 1:
        # Lane-axis reduction: flatten leading dims to rows, stream (tm, tl).
        lead = x.shape[:-1]
        L = x.shape[-1]
        M = math.prod(lead) if lead else 1
        out = _mean_last_axis(x.reshape(M, L))
        return out.reshape(lead)

    # Sublane-axis reduction: bring the reduced axis to position -2, keeping the
    # original last axis on lanes. This is a no-op (no HBM relayout) for the
    # common channel-pooling case axis == ndim - 2 (e.g. NCL, dim=1).
    perm = tuple(a for a in range(ndim) if a not in (axis, ndim - 1)) + (axis, ndim - 1)
    xt = x if axis == ndim - 2 else jnp.transpose(x, perm)
    lead = xt.shape[:-2]
    R, L = xt.shape[-2], xt.shape[-1]
    B = math.prod(lead) if lead else 1
    itemsize = jnp.dtype(x.dtype).itemsize

    tb = B if B <= 256 else 256
    tl = _pick_lane_tile(L, tb * R, itemsize)
    while tl is None and tb > 8:
        tb = max(8, (tb // 2) // 8 * 8)
        tl = _pick_lane_tile(L, tb * R, itemsize)

    if tl is not None:
        out = _mean_sublane_reduce_3d(xt.reshape(B, R, L), tb, tl)
    else:
        # (tb, R, tl) block cannot fit VMEM at any lane tile: fall back to the
        # lane-reduce path (extra relayout, only for pathological R*L).
        out = _mean_last_axis(
            jnp.moveaxis(xt, -2, -1).reshape(B * L, R)).reshape(B, L)
    return out.reshape(lead + (L,))


if __name__ == "__main__":
    key = jax.random.PRNGKey(0)
    k1, k2, k3 = jax.random.split(key, 3)

    # NCL input: batch=2, channels=4, length=16.
    x = jax.random.normal(k1, (2, 4, 16), dtype=jnp.float32)

    # dim=-1 -> lane-reduce path; dim=1 -> sublane path (no transpose);
    # dim=0  -> sublane path after a leading-axis permute.
    for dim in (-1, 1, 0):
        out = jax.block_until_ready(global_avg_pool_1d(x, dim))
        ref = jnp.mean(x, axis=dim)
        assert out.shape == ref.shape, (dim, out.shape, ref.shape)
        assert out.dtype == ref.dtype, (dim, out.dtype, ref.dtype)
        assert jnp.allclose(out, ref, atol=1e-5, rtol=1e-5), f"mismatch dim={dim}"

    # Directly exercise the tiled / accumulating lane-reduce kernel with a
    # multi-step grid (3 row tiles x 2 reduction steps) on a small slab.
    y = jax.random.normal(k2, (24, 256), dtype=jnp.float32)
    out2 = jax.block_until_ready(_mean_lane_reduce_2d(y, tm=8, tl=128))
    ref2 = jnp.mean(y, axis=-1)
    assert jnp.allclose(out2, ref2, atol=1e-5, rtol=1e-5), "mismatch tiled path"

    # bf16 input: f32 accumulation in-kernel, bf16 output dtype preserved.
    z = jax.random.normal(k3, (2, 4, 16), dtype=jnp.bfloat16)
    out3 = jax.block_until_ready(global_avg_pool_1d(z, 1))
    ref3 = jnp.mean(z.astype(jnp.float32), axis=1).astype(jnp.bfloat16)
    assert out3.dtype == jnp.bfloat16
    assert jnp.allclose(out3.astype(jnp.float32), ref3.astype(jnp.float32),
                        atol=2e-2, rtol=2e-2), "mismatch bf16 path"

    print("KERNEL_OK")
</pallas_src>

<mosaic_0001>
module attributes {stable_mosaic.version = 11 : i64} {
  func.func @_mean_lane_kernel(%arg0: i32, %arg1: i32, %arg2: memref<8x16xf32, #tpu.memory_space<vmem>>, %arg3: memref<8x1xf32, #tpu.memory_space<vmem>>, %arg4: memref<8x1xf32, #tpu.memory_space<vmem>>) attributes {dimension_semantics = [#tpu.dimension_semantics<parallel>, #tpu.dimension_semantics<arbitrary>], iteration_bounds = array<i64: 1, 1>, scalar_prefetch = 0 : i64, scratch_operands = 1 : i64, tpu.core_type = #tpu.core_type<tc>, window_params = [{transform_indices = @transform_0, window_bounds = array<i64: 8, 16>}, {transform_indices = @transform_1, window_bounds = array<i64: 8, 1>}]} {
    %c0_i32 = arith.constant 0 : i32
    %0 = arith.cmpi eq, %arg1, %c0_i32 : i32
    %1 = arith.extui %0 : i1 to i32
    %c0_i32_0 = arith.constant 0 : i32
    %2 = arith.cmpi ne, %1, %c0_i32_0 : i32
    scf.if %2 {
      %cst_8 = arith.constant 0.000000e+00 : f32
      %12 = vector.broadcast %cst_8 : f32 to vector<8x1xf32>
      %c0_9 = arith.constant 0 : index
      %c0_10 = arith.constant 0 : index
      %13 = vector.load %arg4[%c0_9, %c0_10] : memref<8x1xf32, #tpu.memory_space<vmem>>, vector<8x1xf32>
      tpu.vector_store %arg4[%c0_9, %c0_10], %12 {strides = array<i32>} : memref<8x1xf32, #tpu.memory_space<vmem>>, vector<8x1xf32>,
    } else {
    }
    %c0 = arith.constant 0 : index
    %c0_1 = arith.constant 0 : index
    %3 = vector.load %arg2[%c0, %c0_1] : memref<8x16xf32, #tpu.memory_space<vmem>>, vector<8x16xf32>
    %c0_2 = arith.constant 0 : index
    %c0_3 = arith.constant 0 : index
    %4 = vector.load %arg4[%c0_2, %c0_3] : memref<8x1xf32, #tpu.memory_space<vmem>>, vector<8x1xf32>
    %cst = arith.constant dense<0.000000e+00> : vector<8xf32>
    %5 = vector.multi_reduction <add>, %3, %cst [1] : vector<8x16xf32> to vector<8xf32>
    %6 = vector.shape_cast %5 : vector<8xf32> to vector<8x1xf32>
    %7 = arith.addf %4, %6 : vector<8x1xf32>
    %c0_4 = arith.constant 0 : index
    %c0_5 = arith.constant 0 : index
    %8 = vector.load %arg4[%c0_4, %c0_5] : memref<8x1xf32, #tpu.memory_space<vmem>>, vector<8x1xf32>
    tpu.vector_store %arg4[%c0_4, %c0_5], %7 {strides = array<i32>} : memref<8x1xf32, #tpu.memory_space<vmem>>, vector<8x1xf32>,
    %c0_i32_6 = arith.constant 0 : i32
    %9 = arith.cmpi eq, %arg1, %c0_i32_6 : i32
    %10 = arith.extui %9 : i1 to i32
    %c0_i32_7 = arith.constant 0 : i32
    %11 = arith.cmpi ne, %10, %c0_i32_7 : i32
    scf.if %11 {
      %c0_8 = arith.constant 0 : index
      %c0_9 = arith.constant 0 : index
      %12 = vector.load %arg4[%c0_8, %c0_9] : memref<8x1xf32, #tpu.memory_space<vmem>>, vector<8x1xf32>
      %cst_10 = arith.constant 6.250000e-02 : f32
      %13 = vector.broadcast %cst_10 : f32 to vector<8x1xf32>
      %14 = arith.mulf %12, %13 : vector<8x1xf32>
      %c0_11 = arith.constant 0 : index
      %c0_12 = arith.constant 0 : index
      %15 = vector.load %arg3[%c0_11, %c0_12] : memref<8x1xf32, #tpu.memory_space<vmem>>, vector<8x1xf32>
      tpu.vector_store %arg3[%c0_11, %c0_12], %14 {strides = array<i32>} : memref<8x1xf32, #tpu.memory_space<vmem>>, vector<8x1xf32>,
    } else {
    }
    return
  }
  func.func @transform_0(%arg0: i32, %arg1: i32) -> (i32, i32) {
    %c0_i32 = arith.constant 0 : i32
    return %arg0, %arg1 : i32, i32
  }
  func.func @transform_1(%arg0: i32, %arg1: i32) -> (i32, i32) {
    %c0_i32 = arith.constant 0 : i32
    %c0_i32_0 = arith.constant 0 : i32
    return %arg0, %c0_i32 : i32, i32
  }
}

</mosaic_0001>

<llo_original>
// kernel: squeeze.1
$region0: #{squeeze.1}
  %s0 = inlined_call_operand.vmem [shape: f32[8], index: 0, kind: input, shape index: {}]
  %s1 = inlined_call_operand.hbm [shape: f32[2,4], index: 1, kind: output, shape index: {}]
  $region1: #{squeeze.1} parent=0
    #allocation0 [shape = 'u8[1024]{0}', space=vmem, size = 0x400, scoped, tag = 'operand span for operand 1']
    #allocation1 [shape = 's32[1]{0}', space=sflag, size = 0x4, scoped, tag = 'scoped memory for squeeze.1']
    #allocation2 [shape = 'u8[4096]{0}', space=vmem, size = 0x1000, scoped, tag = 'scoped mem for output reshape']
    #allocation3 [shape = 'u8[4096]{0}', space=vmem, size = 0x1000, scoped, tag = 'scoped mem for input reshape']
    %2 = vsyncpa [#allocation1], 0
    %s4 = sshll.u32 1, 1
    %s5 = ssub.s32 %s4, 1
    %v6 = vld [vmem:[%s0] sm:%s5]
    %7 = vst [vmem:[#allocation3] sm:%s5] %v6
    %v8 = vld [vmem:[#allocation3] sm:$0x1]
    %vm9 = vcmask 31744
    %10 = vst.msk [vmem:[#allocation2] sm:$0x1] %vm9, %v8
    %v11 = vld [vmem:[#allocation3] sm:$0x1]
    %12 = vrot.lane.b32.xlu0 %v11, 124
    %v13 = vpop.permute.xlu0 %12
    %vm14 = vcmask 31744
    %s15 = scalar_lea.vmem [#allocation2], 1
    %16 = vst.msk [vmem:[%s15] sm:$0x1] %vm14, %v13
    %s18 = sshll.u32 1, 2
    %s19 = ssub.s32 %s18, 1
    %v21 = vld [vmem:[#allocation2] sm:%s19]
    %s22 = sshll.u32 1, 2
    %s23 = ssub.s32 %s22, 1
    %24 = vst [vmem:[#allocation0] sm:%s23] %v21
    %s26 = ssub.s32 32, 32
    %27 = vsyncadd [#allocation1], %s26
    %s29 = sshll.u32 [#allocation0], 4
    %s30 = int_to_ptr.vmem [resolvable:$true] %s29
    %32 = dma.vmem_to_hbm [thread:$0]  %s30, 32, %s1, [#allocation1]
    %33 = dma.done [#allocation1], 32
    %34 = vsyncpa [#allocation1], 1

// kernel: global_avg_pool_1d.1
$region0: #{global_avg_pool_1d.1}
  #allocation0 [shape = 'u32[]', space=smem, size = 0x4, offset = 0x4, fixed_abs, tag = 'smem constant byte address 0x4 - core index']
  #allocation1 [shape = 'u32[144,128]{1,0:T(1,128)}', space=vmem, size = 0x12000, scoped, tag = 'internal scratch']
  #allocation2 [shape = 'f32[8,1]{1,0:T(8,128)}', space=vmem, size = 0x1000, scoped, tag = 'scratch operand']
  %s0 = inlined_call_operand.hbm [shape: f32[8,16], index: 0, kind: input, shape index: {}]
  %s1 = inlined_call_operand.vmem [shape: f32[8,1], index: 1, kind: output, shape index: {}]
  %s2 = sld [smem:[#allocation0]]
  $region26: #{global_avg_pool_1d.1} parent=0
    _
  %s4 = ssub.s32 1, %s2
  %s5 = scalar_select 0, %s4, %s2
  $region1: #{global_avg_pool_1d.1} parent=0
    #allocation3 [shape = 'u8[4096]{0}', space=vmem, size = 0x1000, scoped, tag = 'input window, operand 0, single buffered']
    #allocation4 [shape = 's32[1]{0}', space=sflag, size = 0x4, scoped, tag = 'scoped memory for global_avg_pool_1d.1']
    %6 = vsyncpa [#allocation4], 0
    // Predicated region
    $region2: #{global_avg_pool_1d.1} parent=1 // pred_check
      _
    $region3: #{global_avg_pool_1d.1} parent=1 // pred_check_branch
      %8 = sbr.rel (0) target = $region5
    $region4: #{global_avg_pool_1d.1} parent=1 // pred_region
      %s10 = ssub.s32 128, 128
      %11 = vsyncadd [#allocation4], %s10
      %s13 = sshll.u32 [#allocation3], 4
      %s14 = int_to_ptr.vmem [resolvable:$true] %s13
      %16 = dma.hbm_to_vmem [thread:$0]  %s0, 128, %s14, [#allocation4]
    $region5: #{global_avg_pool_1d.1} parent=1 // pred_fallthru
      _
    // Predicated region
    $region6: #{global_avg_pool_1d.1} parent=1 // pred_check
      _
    $region7: #{global_avg_pool_1d.1} parent=1 // pred_check_branch
      %18 = sbr.rel (0) target = $region9
    $region8: #{global_avg_pool_1d.1} parent=1 // pred_region
      %19 = dma.done [#allocation4], 128
    $region9: #{global_avg_pool_1d.1} parent=1 // pred_fallthru
      _
    %p20 = scmp.eq.s32.totalorder 0, 0
    // Predicated region
    $region10: #{global_avg_pool_1d.1} parent=1 // pred_check
      %p21 = pneg %p20
    $region11: #{global_avg_pool_1d.1} parent=1 // pred_check_branch
      %23 = sbr.rel (%p21) target = $region13
    $region12: #{global_avg_pool_1d.1} parent=1 // pred_region
      %vm24 = vcmask 7168
      %25 = vst.msk [vmem:[#allocation2] sm:$0xff] %vm24, 0.0
    $region13: #{global_avg_pool_1d.1} parent=1 // pred_fallthru
      _
    %v26 = vld [vmem:[#allocation3] sm:$0xff]
    %v27 = vld [vmem:[#allocation2] sm:$0xff]
    %vm28 = vcmask 130048
    %v29 = vsel %vm28, %v26, 0.0
    %30 = vadd.xlane.f32.xlu0 %v29
    %v31 = vpop.xlane.xlu0 %30
    %v32 = vadd.f32 %v27, %v31
    %vm33 = vcmask 7168
    %34 = vst.msk [vmem:[#allocation2] sm:$0xff] %vm33, %v32
    // Predicated region
    $region14: #{global_avg_pool_1d.1} parent=1 // pred_check
      %p35 = pneg %p20
    $region15: #{global_avg_pool_1d.1} parent=1 // pred_check_branch
      %37 = sbr.rel (%p35) target = $region17
    $region16: #{global_avg_pool_1d.1} parent=1 // pred_region
      %v38 = vld [vmem:[#allocation2] sm:$0xff]
      %v39 = vmul.f32 %v38, 0.0625
      %40 = vst.msk [vmem:[%s1] sm:$0xff] %vm33, %v39
    $region17: #{global_avg_pool_1d.1} parent=1 // pred_fallthru
      _
    // Predicated region
    $region18: #{global_avg_pool_1d.1} parent=1 // pred_check
      _
    $region19: #{global_avg_pool_1d.1} parent=1 // pred_check_branch
      %42 = sbr.rel (0) target = $region21
    $region20: #{global_avg_pool_1d.1} parent=1 // pred_region
      _
    $region21: #{global_avg_pool_1d.1} parent=1 // pred_fallthru
      _
    // Predicated region
    $region22: #{global_avg_pool_1d.1} parent=1 // pred_check
      _
    $region23: #{global_avg_pool_1d.1} parent=1 // pred_check_branch
      %44 = sbr.rel (0) target = $region25
    $region24: #{global_avg_pool_1d.1} parent=1 // pred_region
      _
    $region25: #{global_avg_pool_1d.1} parent=1 // pred_fallthru
      _
    %45 = vsyncpa [#allocation4], 1

</llo_original>
